<compile_context>
chip_gen: v7x
topology: tpu7x:2x2x1
jax: 0.10.0
libtpu: 0.0.40
codegen_flags: <defaults>
</compile_context>

<pallas_src>
import functools

import jax
import jax.numpy as jnp
from jax.experimental import pallas as pl
from jax.experimental.pallas import tpu as pltpu

HIDDEN = 128       # hidden width of fc1/fc2 (matches the PyTorch module)
HEAD_WIDTH = 128   # lane-dense fused head width (actor logits + critic value + zero pad)


def _round_up(x, m):
    return ((x + m - 1) // m) * m


def actor_critic_kernel(x_ref, w1_ref, wh_ref, b_ref, out_ref, *, n_actions):
    # fc1 + ReLU  (bf16 MXU operands, f32 accumulate / f32 vector math)
    x = x_ref[...].astype(jnp.bfloat16)
    h1 = jnp.dot(x, w1_ref[...], preferred_element_type=jnp.float32) + b_ref[0]
    h1 = jnp.maximum(h1, 0.0)

    # fc2 + ReLU  (wh_ref[0] is w2)
    h2 = jnp.dot(h1.astype(jnp.bfloat16), wh_ref[0],
                 preferred_element_type=jnp.float32) + b_ref[1]
    h2 = jnp.maximum(h2, 0.0)

    # fused head (wh_ref[1]): lanes [0, n_actions) = actor logits,
    # lane n_actions = critic value, remaining lanes = 0 (zero-padded columns/bias).
    z = jnp.dot(h2.astype(jnp.bfloat16), wh_ref[1],
                preferred_element_type=jnp.float32) + b_ref[2]

    # lane mask built at (1, HEAD_WIDTH); broadcasts over the sublane dim below.
    lane = jax.lax.broadcasted_iota(jnp.int32, (1, HEAD_WIDTH), 1)
    is_action = lane < n_actions

    # softmax over the real action lanes only (mask pad + value lanes with -inf).
    logits = jnp.where(is_action, z, -jnp.inf)
    m = jnp.max(logits, axis=-1, keepdims=True)
    e = jnp.where(is_action, jnp.exp(logits - m), 0.0)
    denom = jnp.sum(e, axis=-1, keepdims=True)
    probs = e / denom  # exact division so each row sums to 1 within f32 eps

    # lane-dense [tb, 128] slab: probs in action lanes, raw head output elsewhere
    # (critic value at lane n_actions, zeros in padded lanes).
    out_ref[...] = jnp.where(is_action, probs, z).astype(out_ref.dtype)


def actor_critic_forward(state, packed_params, *, n_actions, block_b=1024):
    """state: [B, input_dims] f32. Returns (action_probs [B, n_actions], value [B, 1])."""
    w1, wh, b = packed_params
    B, input_dims = state.shape

    # Batch tile: multiple of 8 sublanes, up to block_b rows per grid step.
    tb = min(block_b, _round_up(B, 8))
    # Give the "parallel" batch axis >= 2 grid steps when possible so the second
    # TensorCore (v7x megacore) has work to shard.
    if B > 16 and pl.cdiv(B, tb) < 2:
        tb = _round_up(pl.cdiv(B, 2), 8)
    grid_b = pl.cdiv(B, tb)  # ragged tail handled by Pallas block masking (no jnp.pad)

    kernel = functools.partial(actor_critic_kernel, n_actions=n_actions)
    out = pl.pallas_call(
        kernel,
        out_shape=jax.ShapeDtypeStruct((B, HEAD_WIDTH), jnp.float32),
        grid=(grid_b,),
        in_specs=[
            pl.BlockSpec((tb, input_dims), lambda i: (i, 0)),            # state tile
            pl.BlockSpec((input_dims, HIDDEN), lambda i: (0, 0)),        # w1 (resident, bf16)
            pl.BlockSpec((2, HIDDEN, HEAD_WIDTH), lambda i: (0, 0, 0)),  # [w2, w_head] (bf16)
            pl.BlockSpec((3, 1, HEAD_WIDTH), lambda i: (0, 0, 0)),       # [b1, b2, b_head] (f32)
        ],
        out_specs=pl.BlockSpec((tb, HEAD_WIDTH), lambda i: (i, 0)),
        compiler_params=pltpu.CompilerParams(
            dimension_semantics=("parallel",)),
    )(state, w1, wh, b)

    probs = out[:, :n_actions]
    value = out[:, n_actions:n_actions + 1]
    return probs, value


def init_params(key, input_dims, n_actions, hidden=HIDDEN):
    """Deterministic synthetic init mimicking nn.Linear's U(-1/sqrt(fan_in), 1/sqrt(fan_in)).

    Weights stored as [in_features, out_features] (transpose of PyTorch layout)
    so the kernel issues plain x @ W MXU matmuls."""
    def linear(k, fan_in, fan_out):
        kw, kb = jax.random.split(k)
        bound = 1.0 / jnp.sqrt(fan_in)
        w = jax.random.uniform(kw, (fan_in, fan_out), jnp.float32, -bound, bound)
        b = jax.random.uniform(kb, (fan_out,), jnp.float32, -bound, bound)
        return w, b

    k1, k2, k3, k4 = jax.random.split(key, 4)
    w1, b1 = linear(k1, input_dims, hidden)
    w2, b2 = linear(k2, hidden, hidden)
    wa, ba = linear(k3, hidden, n_actions)
    wc, bc = linear(k4, hidden, 1)
    return (w1, b1, w2, b2, wa, ba, wc, bc)


def pack_params(raw_params, n_actions):
    """Fuse actor/critic heads into one 128-wide weight; pack into 3 buffers.

    Weight matrices are stored in bf16 (MXU operands); biases stay f32."""
    w1, b1, w2, b2, wa, ba, wc, bc = raw_params

    w_head = jnp.zeros((HIDDEN, HEAD_WIDTH), jnp.float32)
    w_head = w_head.at[:, :n_actions].set(wa)
    w_head = w_head.at[:, n_actions].set(wc[:, 0])

    b_head = jnp.zeros((HEAD_WIDTH,), jnp.float32)
    b_head = b_head.at[:n_actions].set(ba)
    b_head = b_head.at[n_actions].set(bc[0])

    wh = jnp.stack([w2, w_head], axis=0).astype(jnp.bfloat16)              # [2, 128, 128] bf16
    b = jnp.stack([b1, b2, b_head], axis=0).reshape(3, 1, HEAD_WIDTH)       # [3, 1, 128] f32
    return (w1.astype(jnp.bfloat16), wh, b)


if __name__ == "__main__":
    key = jax.random.PRNGKey(0)
    k_state, k_params = jax.random.split(key)

    batch, input_dims, n_actions = 2, 32, 8
    state = jax.random.normal(k_state, (batch, input_dims), jnp.float32)
    raw_params = init_params(k_params, input_dims, n_actions)
    packed = pack_params(raw_params, n_actions)

    fwd = jax.jit(functools.partial(actor_critic_forward, n_actions=n_actions))
    probs, value = jax.block_until_ready(fwd(state, packed))

    w1, b1, w2, b2, wa, ba, wc, bc = raw_params

    # Reference matching the kernel's numerics (bf16 matmul operands, f32 accumulate).
    def bf(a):
        return a.astype(jnp.bfloat16)

    h1 = jnp.maximum(jnp.dot(bf(state), bf(w1), preferred_element_type=jnp.float32) + b1, 0.0)
    h2 = jnp.maximum(jnp.dot(bf(h1), bf(w2), preferred_element_type=jnp.float32) + b2, 0.0)
    ref_logits = jnp.dot(bf(h2), bf(wa), preferred_element_type=jnp.float32) + ba
    ref_probs = jax.nn.softmax(ref_logits, axis=-1)
    ref_value = jnp.dot(bf(h2), bf(wc), preferred_element_type=jnp.float32) + bc

    # Full-precision reference of the original module (loose tolerance: bf16 weights).
    h1f = jnp.maximum(state @ w1 + b1, 0.0)
    h2f = jnp.maximum(h1f @ w2 + b2, 0.0)
    ref_probs_f32 = jax.nn.softmax(h2f @ wa + ba, axis=-1)
    ref_value_f32 = h2f @ wc + bc

    assert probs.shape == (batch, n_actions) and value.shape == (batch, 1)
    assert jnp.allclose(probs, ref_probs, atol=1e-4), float(jnp.max(jnp.abs(probs - ref_probs)))
    assert jnp.allclose(value, ref_value, atol=1e-4), float(jnp.max(jnp.abs(value - ref_value)))
    assert jnp.allclose(jnp.sum(probs, axis=-1), 1.0, atol=1e-4)
    assert jnp.allclose(probs, ref_probs_f32, atol=5e-2)
    assert jnp.allclose(value, ref_value_f32, atol=5e-2)

    print("KERNEL_OK")
</pallas_src>

<mosaic_0001>
module attributes {stable_mosaic.version = 11 : i64} {
  func.func @actor_critic_kernel(%arg0: i32, %arg1: memref<8x32xf32, #tpu.memory_space<vmem>>, %arg2: memref<32x128xbf16, #tpu.memory_space<vmem>>, %arg3: memref<2x128x128xbf16, #tpu.memory_space<vmem>>, %arg4: memref<3x1x128xf32, #tpu.memory_space<vmem>>, %arg5: memref<8x128xf32, #tpu.memory_space<vmem>>) attributes {dimension_semantics = [#tpu.dimension_semantics<parallel>], iteration_bounds = array<i64: 1>, scalar_prefetch = 0 : i64, scratch_operands = 0 : i64, tpu.core_type = #tpu.core_type<tc>, window_params = [{transform_indices = @transform_0, window_bounds = array<i64: 8, 32>}, {pipeline_mode = #tpu.pipeline_mode<synchronous>, transform_indices = @transform_1, window_bounds = array<i64: 32, 128>}, {pipeline_mode = #tpu.pipeline_mode<synchronous>, transform_indices = @transform_2, window_bounds = array<i64: 2, 128, 128>}, {pipeline_mode = #tpu.pipeline_mode<synchronous>, transform_indices = @transform_3, window_bounds = array<i64: 3, 1, 128>}, {transform_indices = @transform_4, window_bounds = array<i64: 8, 128>}]} {
    %c0 = arith.constant 0 : index
    %c0_0 = arith.constant 0 : index
    %0 = vector.load %arg1[%c0, %c0_0] : memref<8x32xf32, #tpu.memory_space<vmem>>, vector<8x32xf32>
    %1 = arith.truncf %0 : vector<8x32xf32> to vector<8x32xbf16>
    %c0_1 = arith.constant 0 : index
    %c0_2 = arith.constant 0 : index
    %2 = vector.load %arg2[%c0_1, %c0_2] : memref<32x128xbf16, #tpu.memory_space<vmem>>, vector<32x128xbf16>
    %cst = arith.constant dense<0.000000e+00> : vector<8x128xf32>
    %3 = tpu.matmul %1, %2, %cst {dimension_numbers = #tpu.dot_dimension_numbers<[1], [0], [0], [1], [0, 0, 1, 1], [], []>} : vector<8x32xbf16>, vector<32x128xbf16>, vector<8x128xf32> -> vector<8x128xf32>
    %c0_3 = arith.constant 0 : index
    %c0_4 = arith.constant 0 : index
    %c0_5 = arith.constant 0 : index
    %4 = vector.load %arg4[%c0_3, %c0_4, %c0_5] : memref<3x1x128xf32, #tpu.memory_space<vmem>>, vector<1x1x128xf32>
    %5 = vector.shape_cast %4 : vector<1x1x128xf32> to vector<1x128xf32>
    %6 = vector.broadcast %5 : vector<1x128xf32> to vector<8x128xf32>
    %7 = arith.addf %3, %6 : vector<8x128xf32>
    %cst_6 = arith.constant 0.000000e+00 : f32
    %8 = vector.broadcast %cst_6 : f32 to vector<8x128xf32>
    %9 = arith.maximumf %7, %8 : vector<8x128xf32>
    %10 = arith.truncf %9 : vector<8x128xf32> to vector<8x128xbf16>
    %c0_7 = arith.constant 0 : index
    %c0_8 = arith.constant 0 : index
    %c0_9 = arith.constant 0 : index
    %11 = vector.load %arg3[%c0_7, %c0_8, %c0_9] : memref<2x128x128xbf16, #tpu.memory_space<vmem>>, vector<1x128x128xbf16>
    %12 = vector.shape_cast %11 : vector<1x128x128xbf16> to vector<128x128xbf16>
    %cst_10 = arith.constant dense<0.000000e+00> : vector<8x128xf32>
    %13 = tpu.matmul %10, %12, %cst_10 {dimension_numbers = #tpu.dot_dimension_numbers<[1], [0], [0], [1], [0, 0, 1, 1], [], []>} : vector<8x128xbf16>, vector<128x128xbf16>, vector<8x128xf32> -> vector<8x128xf32>
    %c1 = arith.constant 1 : index
    %c0_11 = arith.constant 0 : index
    %c0_12 = arith.constant 0 : index
    %14 = vector.load %arg4[%c1, %c0_11, %c0_12] : memref<3x1x128xf32, #tpu.memory_space<vmem>>, vector<1x1x128xf32>
    %15 = vector.shape_cast %14 : vector<1x1x128xf32> to vector<1x128xf32>
    %16 = vector.broadcast %15 : vector<1x128xf32> to vector<8x128xf32>
    %17 = arith.addf %13, %16 : vector<8x128xf32>
    %cst_13 = arith.constant 0.000000e+00 : f32
    %18 = vector.broadcast %cst_13 : f32 to vector<8x128xf32>
    %19 = arith.maximumf %17, %18 : vector<8x128xf32>
    %20 = arith.truncf %19 : vector<8x128xf32> to vector<8x128xbf16>
    %c1_14 = arith.constant 1 : index
    %c0_15 = arith.constant 0 : index
    %c0_16 = arith.constant 0 : index
    %21 = vector.load %arg3[%c1_14, %c0_15, %c0_16] : memref<2x128x128xbf16, #tpu.memory_space<vmem>>, vector<1x128x128xbf16>
    %22 = vector.shape_cast %21 : vector<1x128x128xbf16> to vector<128x128xbf16>
    %cst_17 = arith.constant dense<0.000000e+00> : vector<8x128xf32>
    %23 = tpu.matmul %20, %22, %cst_17 {dimension_numbers = #tpu.dot_dimension_numbers<[1], [0], [0], [1], [0, 0, 1, 1], [], []>} : vector<8x128xbf16>, vector<128x128xbf16>, vector<8x128xf32> -> vector<8x128xf32>
    %c2 = arith.constant 2 : index
    %c0_18 = arith.constant 0 : index
    %c0_19 = arith.constant 0 : index
    %24 = vector.load %arg4[%c2, %c0_18, %c0_19] : memref<3x1x128xf32, #tpu.memory_space<vmem>>, vector<1x1x128xf32>
    %25 = vector.shape_cast %24 : vector<1x1x128xf32> to vector<1x128xf32>
    %26 = vector.broadcast %25 : vector<1x128xf32> to vector<8x128xf32>
    %27 = arith.addf %23, %26 : vector<8x128xf32>
    %28 = tpu.iota {dimensions = array<i32: 1>} : vector<1x128xi32>
    %c8_i32 = arith.constant 8 : i32
    %29 = vector.broadcast %c8_i32 : i32 to vector<1x128xi32>
    %30 = arith.cmpi slt, %28, %29 : vector<1x128xi32>
    %cst_20 = arith.constant 0xFF800000 : f32
    %31 = vector.shape_cast %30 : vector<1x128xi1> to vector<1x128xi1>
    %32 = vector.broadcast %31 : vector<1x128xi1> to vector<8x128xi1>
    %33 = vector.broadcast %cst_20 : f32 to vector<8x128xf32>
    %34 = arith.select %32, %27, %33 : vector<8x128xi1>, vector<8x128xf32>
    %cst_21 = arith.constant dense<0xFF800000> : vector<8xf32>
    %35 = vector.multi_reduction <maximumf>, %34, %cst_21 [1] : vector<8x128xf32> to vector<8xf32>
    %36 = vector.shape_cast %35 : vector<8xf32> to vector<8x1xf32>
    %37 = vector.broadcast %36 : vector<8x1xf32> to vector<8x128xf32>
    %38 = arith.subf %34, %37 : vector<8x128xf32>
    %39 = math.exp %38 : vector<8x128xf32>
    %cst_22 = arith.constant 0.000000e+00 : f32
    %40 = vector.shape_cast %30 : vector<1x128xi1> to vector<1x128xi1>
    %41 = vector.broadcast %40 : vector<1x128xi1> to vector<8x128xi1>
    %42 = vector.broadcast %cst_22 : f32 to vector<8x128xf32>
    %43 = arith.select %41, %39, %42 : vector<8x128xi1>, vector<8x128xf32>
    %cst_23 = arith.constant dense<0.000000e+00> : vector<8xf32>
    %44 = vector.multi_reduction <add>, %43, %cst_23 [1] : vector<8x128xf32> to vector<8xf32>
    %45 = vector.shape_cast %44 : vector<8xf32> to vector<8x1xf32>
    %46 = vector.broadcast %45 : vector<8x1xf32> to vector<8x128xf32>
    %47 = arith.divf %43, %46 : vector<8x128xf32>
    %48 = vector.shape_cast %30 : vector<1x128xi1> to vector<1x128xi1>
    %49 = vector.broadcast %48 : vector<1x128xi1> to vector<8x128xi1>
    %50 = arith.select %49, %47, %27 : vector<8x128xi1>, vector<8x128xf32>
    %c0_24 = arith.constant 0 : index
    %c0_25 = arith.constant 0 : index
    %51 = vector.load %arg5[%c0_24, %c0_25] : memref<8x128xf32, #tpu.memory_space<vmem>>, vector<8x128xf32>
    tpu.vector_store %arg5[%c0_24, %c0_25], %50 {strides = array<i32>} : memref<8x128xf32, #tpu.memory_space<vmem>>, vector<8x128xf32>,
    return
  }
  func.func @transform_0(%arg0: i32) -> (i32, i32) {
    %c0_i32 = arith.constant 0 : i32
    %c0_i32_0 = arith.constant 0 : i32
    return %arg0, %c0_i32 : i32, i32
  }
  func.func @transform_1(%arg0: i32) -> (i32, i32) {
    %c0_i32 = arith.constant 0 : i32
    %c0_i32_0 = arith.constant 0 : i32
    %c0_i32_1 = arith.constant 0 : i32
    return %c0_i32, %c0_i32_0 : i32, i32
  }
  func.func @transform_2(%arg0: i32) -> (i32, i32, i32) {
    %c0_i32 = arith.constant 0 : i32
    %c0_i32_0 = arith.constant 0 : i32
    %c0_i32_1 = arith.constant 0 : i32
    %c0_i32_2 = arith.constant 0 : i32
    return %c0_i32, %c0_i32_0, %c0_i32_1 : i32, i32, i32
  }
  func.func @transform_3(%arg0: i32) -> (i32, i32, i32) {
    %c0_i32 = arith.constant 0 : i32
    %c0_i32_0 = arith.constant 0 : i32
    %c0_i32_1 = arith.constant 0 : i32
    %c0_i32_2 = arith.constant 0 : i32
    return %c0_i32, %c0_i32_0, %c0_i32_1 : i32, i32, i32
  }
  func.func @transform_4(%arg0: i32) -> (i32, i32) {
    %c0_i32 = arith.constant 0 : i32
    %c0_i32_0 = arith.constant 0 : i32
    return %arg0, %c0_i32 : i32, i32
  }
}

</mosaic_0001>

<llo_original>
// kernel: actor_critic_forward.1
$region0: #{actor_critic_forward.1}
  #allocation0 [shape = 'u32[]', space=smem, size = 0x4, offset = 0x4, fixed_abs, tag = 'smem constant byte address 0x4 - core index']
  #allocation1 [shape = 'u32[144,128]{1,0:T(1,128)}', space=vmem, size = 0x12000, scoped, tag = 'internal scratch']
  %s0 = inlined_call_operand.hbm [shape: f32[2,32], index: 0, kind: input, shape index: {}]
  %s1 = inlined_call_operand.hbm [shape: bf16[32,128], index: 1, kind: input, shape index: {}]
  %s2 = inlined_call_operand.hbm [shape: bf16[2,128,128], index: 2, kind: input, shape index: {}]
  %s3 = inlined_call_operand.vmem [shape: f32[3,1,128], index: 3, kind: input, shape index: {}]
  %s4 = inlined_call_operand.vmem [shape: f32[2,128], index: 4, kind: output, shape index: {}]
  %s5 = sld [smem:[#allocation0]]
  $region68: #{actor_critic_forward.1} parent=0
    _
  %s7 = ssub.s32 1, %s5
  %s8 = scalar_select 0, %s7, %s5
  $region1: #{actor_critic_forward.1} parent=0
    #allocation2 [shape = 'u8[4096]{0}', space=vmem, size = 0x1000, scoped, tag = 'input window, operand 0, single buffered']
    #allocation3 [shape = 's32[1]{0}', space=sflag, size = 0x4, scoped, tag = 'scoped memory for actor_critic_forward.1']
    #allocation4 [shape = 'u8[8192]{0}', space=vmem, size = 0x2000, scoped, tag = 'input window, operand 1, single buffered']
    #allocation5 [shape = 's32[1]{0}', space=sflag, size = 0x4, scoped, tag = 'scoped memory for actor_critic_forward.1']
    #allocation6 [shape = 'u8[65536]{0}', space=vmem, size = 0x10000, scoped, tag = 'input window, operand 2, single buffered']
    #allocation7 [shape = 'u8[4096]{0}', space=vmem, size = 0x1000, scoped, tag = 'output window, operand 0, single buffered']
    %9 = vsyncpa [#allocation3], 0
    %10 = vsyncpa [#allocation5], 0
    // Predicated region
    $region2: #{actor_critic_forward.1} parent=1 // pred_check
      _
    $region3: #{actor_critic_forward.1} parent=1 // pred_check_branch
      %12 = sbr.rel (0) target = $region5
    $region4: #{actor_critic_forward.1} parent=1 // pred_region
      %s14 = ssub.s32 128, 32
      %15 = vsyncadd [#allocation3], %s14
      %s16 = sshll.u32 [#allocation2], 4
      %s17 = int_to_ptr.vmem [resolvable:$true] %s16
      %22 = dma.hbm_to_vmem [thread:$0]  %s0, 32, %s17, [#allocation3], 32, 32, 2
    $region5: #{actor_critic_forward.1} parent=1 // pred_fallthru
      _
    // Predicated region
    $region6: #{actor_critic_forward.1} parent=1 // pred_check
      _
    $region7: #{actor_critic_forward.1} parent=1 // pred_check_branch
      %24 = sbr.rel (0) target = $region9
    $region8: #{actor_critic_forward.1} parent=1 // pred_region
      %s26 = ssub.s32 256, 256
      %27 = vsyncadd [#allocation5], %s26
      %s28 = sshll.u32 [#allocation4], 4
      %s29 = int_to_ptr.vmem [resolvable:$true] %s28
      %34 = dma.hbm_to_vmem [thread:$0]  %s1, 256, %s29, [#allocation5], 64, 64, 4
    $region9: #{actor_critic_forward.1} parent=1 // pred_fallthru
      _
    // Predicated region
    $region10: #{actor_critic_forward.1} parent=1 // pred_check
      _
    $region11: #{actor_critic_forward.1} parent=1 // pred_check_branch
      %36 = sbr.rel (0) target = $region13
    $region12: #{actor_critic_forward.1} parent=1 // pred_region
      %s38 = ssub.s32 2048, 2048
      %39 = vsyncadd [#allocation5], %s38
      %s40 = sshll.u32 [#allocation6], 4
      %s41 = int_to_ptr.vmem [resolvable:$true] %s40
      %46 = dma.hbm_to_vmem [thread:$0]  %s2, 2048, %s41, [#allocation5], 64, 64, 4
    $region13: #{actor_critic_forward.1} parent=1 // pred_fallthru
      _
    // Predicated region
    $region14: #{actor_critic_forward.1} parent=1 // pred_check
      _
    $region15: #{actor_critic_forward.1} parent=1 // pred_check_branch
      %48 = sbr.rel (0) target = $region17
    $region16: #{actor_critic_forward.1} parent=1 // pred_region
      _
    $region17: #{actor_critic_forward.1} parent=1 // pred_fallthru
      _
    // Predicated region
    $region18: #{actor_critic_forward.1} parent=1 // pred_check
      _
    $region19: #{actor_critic_forward.1} parent=1 // pred_check_branch
      %50 = sbr.rel (0) target = $region21
    $region20: #{actor_critic_forward.1} parent=1 // pred_region
      %51 = dma.done [#allocation3], 128
    $region21: #{actor_critic_forward.1} parent=1 // pred_fallthru
      _
    // Predicated region
    $region22: #{actor_critic_forward.1} parent=1 // pred_check
      _
    $region23: #{actor_critic_forward.1} parent=1 // pred_check_branch
      %53 = sbr.rel (0) target = $region25
    $region24: #{actor_critic_forward.1} parent=1 // pred_region
      %54 = dma.done [#allocation5], 256
    $region25: #{actor_critic_forward.1} parent=1 // pred_fallthru
      _
    // Predicated region
    $region26: #{actor_critic_forward.1} parent=1 // pred_check
      _
    $region27: #{actor_critic_forward.1} parent=1 // pred_check_branch
      %56 = sbr.rel (0) target = $region29
    $region28: #{actor_critic_forward.1} parent=1 // pred_region
      %57 = dma.done [#allocation5], 2048
    $region29: #{actor_critic_forward.1} parent=1 // pred_fallthru
      _
    %v59 = vld [vmem:[#allocation2] sm:$0xff]
    %v60 = vpack.c.bf16 %v59, %v59
    %v61 = vld [vmem:[#allocation4] sm:$0xf]
    %v62 = vld [vmem:[#allocation4 + $0x4] sm:$0xf]
    %v63 = vld [vmem:[#allocation4 + $0x8] sm:$0xf]
    %v64 = vld [vmem:[#allocation4 + $0xc] sm:$0xf]
    %v65 = vld [vmem:[%s3] sm:$0x1]
    %v67 = vlaneseq
    %v68 = vshrl.u32 %v67, 7
    %v69 = vsub.s32 0, %v68
    %v70 = vrot.slane %v65, %v69
    %v76 = vunpack.c.l.b16 %v61
    %v77 = vunpack.c.l.b16 %v62
    %v78 = vunpack.c.l.b16 %v63
    %v79 = vunpack.c.l.b16 %v64
    %v80 = vpack.c.b16 %v77, %v76
    %v81 = vpack.c.b16 %v79, %v78
    %vm84 = vcmask 261120
    %v86 = vsel %vm84, %v60, 0
    %88 = vmatprep.subr.bf16.mxu0 0
    %89 = vmatpush1.bf16.msra.mxu0 %v80
    %90 = vmatprep.subr.bf16.mxu0 0
    %91 = vmatpush1.bf16.msra.mxu0 %v81
    %92 = vmatprep.subr.bf16.mxu0 0
    %93 = vmatpush1.bf16.msra.mxu0 0
    %94 = vmatprep.subr.bf16.mxu0 0
    %95 = vmatpush1.bf16.msra.mxu0 0
    %96 = vmatprep.subr.bf16.mxu0 0
    %97 = vmatpush1.bf16.msra.mxu0 0
    %98 = vmatprep.subr.bf16.mxu0 0
    %99 = vmatpush1.bf16.msra.mxu0 0
    %100 = vmatprep.subr.bf16.mxu0 0
    %101 = vmatpush1.bf16.msra.mxu0 0
    %102 = vmatprep.subr.bf16.mxu0 0
    %103 = vmatpush1.bf16.msra.mxu0 0
    %104 = vmatprep.subr.bf16.mxu0 0
    %105 = vmatpush1.bf16.msra.mxu0 0
    %106 = vmatprep.subr.bf16.mxu0 0
    %107 = vmatpush1.bf16.msra.mxu0 0
    %108 = vmatprep.subr.bf16.mxu0 0
    %109 = vmatpush1.bf16.msra.mxu0 0
    %110 = vmatprep.subr.bf16.mxu0 0
    %111 = vmatpush1.bf16.msra.mxu0 0
    %112 = vmatprep.subr.bf16.mxu0 0
    %113 = vmatpush1.bf16.msra.mxu0 0
    %114 = vmatprep.subr.bf16.mxu0 0
    %115 = vmatpush1.bf16.msra.mxu0 0
    %116 = vmatprep.subr.bf16.mxu0 0
    %117 = vmatpush1.bf16.msra.mxu0 0
    %118 = vmatprep.subr.bf16.mxu0 0
    %119 = vmatpush1.bf16.msra.mxu0 0
    %120 = vmatprep.mubr.bf16.mxu0 0
    %121 = vmatmul.mubr.bf16.gmra.mrb[0].mxu0 %v86
    %v122 = vpop.f32.mrb[0].mxu0
    %v123 = vadd.f32 %v70, %v122
    %v124 = vpop.f32.mrb[0].mxu0
    %v125 = vpop.f32.mrb[0].mxu0
    %v126 = vpop.f32.mrb[0].mxu0
    %127 = vdwg.mxu0
    %v128 = vmax.f32 %v123, 0.0
    %v129 = vpack.c.bf16 %v128, %v128
    %v130 = vld [vmem:[#allocation6] sm:$0xf]
    %v131 = vld [vmem:[#allocation6 + $0x4] sm:$0xf]
    %v132 = vld [vmem:[#allocation6 + $0x8] sm:$0xf]
    %v133 = vld [vmem:[#allocation6 + $0xc] sm:$0xf]
    %v134 = vld [vmem:[#allocation6 + $0x10] sm:$0xf]
    %v135 = vld [vmem:[#allocation6 + $0x14] sm:$0xf]
    %v136 = vld [vmem:[#allocation6 + $0x18] sm:$0xf]
    %v137 = vld [vmem:[#allocation6 + $0x1c] sm:$0xf]
    %v138 = vld [vmem:[#allocation6 + $0x20] sm:$0xf]
    %v139 = vld [vmem:[#allocation6 + $0x24] sm:$0xf]
    %v140 = vld [vmem:[#allocation6 + $0x28] sm:$0xf]
    %v141 = vld [vmem:[#allocation6 + $0x2c] sm:$0xf]
    %v142 = vld [vmem:[#allocation6 + $0x30] sm:$0xf]
    %v143 = vld [vmem:[#allocation6 + $0x34] sm:$0xf]
    %v144 = vld [vmem:[#allocation6 + $0x38] sm:$0xf]
    %v145 = vld [vmem:[#allocation6 + $0x3c] sm:$0xf]
    %s146 = scalar_lea.vmem %s3, 1
    %v147 = vld [vmem:[%s146] sm:$0x1]
    %v149 = vlaneseq
    %v150 = vshrl.u32 %v149, 7
    %v151 = vsub.s32 0, %v150
    %v152 = vrot.slane %v147, %v151
    %v170 = vunpack.c.l.b16 %v130
    %v171 = vunpack.c.l.b16 %v131
    %v172 = vunpack.c.l.b16 %v132
    %v173 = vunpack.c.l.b16 %v133
    %v174 = vunpack.c.l.b16 %v134
    %v175 = vunpack.c.l.b16 %v135
    %v176 = vunpack.c.l.b16 %v136
    %v177 = vunpack.c.l.b16 %v137
    %v178 = vunpack.c.l.b16 %v138
    %v179 = vunpack.c.l.b16 %v139
    %v180 = vunpack.c.l.b16 %v140
    %v181 = vunpack.c.l.b16 %v141
    %v182 = vunpack.c.l.b16 %v142
    %v183 = vunpack.c.l.b16 %v143
    %v184 = vunpack.c.l.b16 %v144
    %v185 = vunpack.c.l.b16 %v145
    %v186 = vpack.c.b16 %v171, %v170
    %v187 = vpack.c.b16 %v173, %v172
    %v188 = vpack.c.b16 %v175, %v174
    %v189 = vpack.c.b16 %v177, %v176
    %v190 = vpack.c.b16 %v179, %v178
    %v191 = vpack.c.b16 %v181, %v180
    %v192 = vpack.c.b16 %v183, %v182
    %v193 = vpack.c.b16 %v185, %v184
    %202 = vmatprep.subr.bf16.mxu0 0
    %203 = vmatpush1.bf16.msra.mxu0 %v186
    %204 = vmatprep.subr.bf16.mxu0 0
    %205 = vmatpush1.bf16.msra.mxu0 %v187
    %206 = vmatprep.subr.bf16.mxu0 0
    %207 = vmatpush1.bf16.msra.mxu0 %v188
    %208 = vmatprep.subr.bf16.mxu0 0
    %209 = vmatpush1.bf16.msra.mxu0 %v189
    %210 = vmatprep.subr.bf16.mxu0 0
    %211 = vmatpush1.bf16.msra.mxu0 %v190
    %212 = vmatprep.subr.bf16.mxu0 0
    %213 = vmatpush1.bf16.msra.mxu0 %v191
    %214 = vmatprep.subr.bf16.mxu0 0
    %215 = vmatpush1.bf16.msra.mxu0 %v192
    %216 = vmatprep.subr.bf16.mxu0 0
    %217 = vmatpush1.bf16.msra.mxu0 %v193
    %218 = vmatprep.subr.bf16.mxu0 0
    %219 = vmatpush1.bf16.msra.mxu0 0
    %220 = vmatprep.subr.bf16.mxu0 0
    %221 = vmatpush1.bf16.msra.mxu0 0
    %222 = vmatprep.subr.bf16.mxu0 0
    %223 = vmatpush1.bf16.msra.mxu0 0
    %224 = vmatprep.subr.bf16.mxu0 0
    %225 = vmatpush1.bf16.msra.mxu0 0
    %226 = vmatprep.subr.bf16.mxu0 0
    %227 = vmatpush1.bf16.msra.mxu0 0
    %228 = vmatprep.subr.bf16.mxu0 0
    %229 = vmatpush1.bf16.msra.mxu0 0
    %230 = vmatprep.subr.bf16.mxu0 0
    %231 = vmatpush1.bf16.msra.mxu0 0
    %232 = vmatprep.subr.bf16.mxu0 0
    %233 = vmatpush1.bf16.msra.mxu0 0
    %234 = vmatprep.mubr.bf16.mxu0 0
    %235 = vmatmul.mubr.bf16.gmra.mrb[0].mxu0 %v129
    %v236 = vpop.f32.mrb[0].mxu0
    %v237 = vadd.f32 %v152, %v236
    %v238 = vpop.f32.mrb[0].mxu0
    %v239 = vpop.f32.mrb[0].mxu0
    %v240 = vpop.f32.mrb[0].mxu0
    %241 = vdwg.mxu0
    %v242 = vmax.f32 %v237, 0.0
    %v243 = vpack.c.bf16 %v242, %v242
    %s244 = scalar_lea.vmem [#allocation6], 64
    %v245 = vld [vmem:[%s244] sm:$0xf]
    %v246 = vld [vmem:[%s244 + $0x4] sm:$0xf]
    %v247 = vld [vmem:[%s244 + $0x8] sm:$0xf]
    %v248 = vld [vmem:[%s244 + $0xc] sm:$0xf]
    %v249 = vld [vmem:[%s244 + $0x10] sm:$0xf]
    %v250 = vld [vmem:[%s244 + $0x14] sm:$0xf]
    %v251 = vld [vmem:[%s244 + $0x18] sm:$0xf]
    %v252 = vld [vmem:[%s244 + $0x1c] sm:$0xf]
    %v253 = vld [vmem:[%s244 + $0x20] sm:$0xf]
    %v254 = vld [vmem:[%s244 + $0x24] sm:$0xf]
    %v255 = vld [vmem:[%s244 + $0x28] sm:$0xf]
    %v256 = vld [vmem:[%s244 + $0x2c] sm:$0xf]
    %v257 = vld [vmem:[%s244 + $0x30] sm:$0xf]
    %v258 = vld [vmem:[%s244 + $0x34] sm:$0xf]
    %v259 = vld [vmem:[%s244 + $0x38] sm:$0xf]
    %v260 = vld [vmem:[%s244 + $0x3c] sm:$0xf]
    %s261 = scalar_lea.vmem %s3, 2
    %v262 = vld [vmem:[%s261] sm:$0x1]
    %v264 = vlaneseq
    %v265 = vshrl.u32 %v264, 7
    %v266 = vsub.s32 0, %v265
    %v267 = vrot.slane %v262, %v266
    %v285 = vunpack.c.l.b16 %v245
    %v286 = vunpack.c.l.b16 %v246
    %v287 = vunpack.c.l.b16 %v247
    %v288 = vunpack.c.l.b16 %v248
    %v289 = vunpack.c.l.b16 %v249
    %v290 = vunpack.c.l.b16 %v250
    %v291 = vunpack.c.l.b16 %v251
    %v292 = vunpack.c.l.b16 %v252
    %v293 = vunpack.c.l.b16 %v253
    %v294 = vunpack.c.l.b16 %v254
    %v295 = vunpack.c.l.b16 %v255
    %v296 = vunpack.c.l.b16 %v256
    %v297 = vunpack.c.l.b16 %v257
    %v298 = vunpack.c.l.b16 %v258
    %v299 = vunpack.c.l.b16 %v259
    %v300 = vunpack.c.l.b16 %v260
    %v301 = vpack.c.b16 %v286, %v285
    %v302 = vpack.c.b16 %v288, %v287
    %v303 = vpack.c.b16 %v290, %v289
    %v304 = vpack.c.b16 %v292, %v291
    %v305 = vpack.c.b16 %v294, %v293
    %v306 = vpack.c.b16 %v296, %v295
    %v307 = vpack.c.b16 %v298, %v297
    %v308 = vpack.c.b16 %v300, %v299
    %317 = vmatprep.subr.bf16.mxu0 0
    %318 = vmatpush1.bf16.msra.mxu0 %v301
    %319 = vmatprep.subr.bf16.mxu0 0
    %320 = vmatpush1.bf16.msra.mxu0 %v302
    %321 = vmatprep.subr.bf16.mxu0 0
    %322 = vmatpush1.bf16.msra.mxu0 %v303
    %323 = vmatprep.subr.bf16.mxu0 0
    %324 = vmatpush1.bf16.msra.mxu0 %v304
    %325 = vmatprep.subr.bf16.mxu0 0
    %326 = vmatpush1.bf16.msra.mxu0 %v305
    %327 = vmatprep.subr.bf16.mxu0 0
    %328 = vmatpush1.bf16.msra.mxu0 %v306
    %329 = vmatprep.subr.bf16.mxu0 0
    %330 = vmatpush1.bf16.msra.mxu0 %v307
    %331 = vmatprep.subr.bf16.mxu0 0
    %332 = vmatpush1.bf16.msra.mxu0 %v308
    %333 = vmatprep.subr.bf16.mxu0 0
    %334 = vmatpush1.bf16.msra.mxu0 0
    %335 = vmatprep.subr.bf16.mxu0 0
    %336 = vmatpush1.bf16.msra.mxu0 0
    %337 = vmatprep.subr.bf16.mxu0 0
    %338 = vmatpush1.bf16.msra.mxu0 0
    %339 = vmatprep.subr.bf16.mxu0 0
    %340 = vmatpush1.bf16.msra.mxu0 0
    %341 = vmatprep.subr.bf16.mxu0 0
    %342 = vmatpush1.bf16.msra.mxu0 0
    %343 = vmatprep.subr.bf16.mxu0 0
    %344 = vmatpush1.bf16.msra.mxu0 0
    %345 = vmatprep.subr.bf16.mxu0 0
    %346 = vmatpush1.bf16.msra.mxu0 0
    %347 = vmatprep.subr.bf16.mxu0 0
    %348 = vmatpush1.bf16.msra.mxu0 0
    %349 = vmatprep.mubr.bf16.mxu0 0
    %350 = vmatmul.mubr.bf16.gmra.mrb[0].mxu0 %v243
    %v351 = vpop.f32.mrb[0].mxu0
    %v352 = vadd.f32 %v267, %v351
    %v353 = vpop.f32.mrb[0].mxu0
    %v354 = vpop.f32.mrb[0].mxu0
    %v355 = vpop.f32.mrb[0].mxu0
    %356 = vdwg.mxu0
    %v357 = vlaneseq
    %v358 = vand.u32 %v357, 127
    %vm359 = vcmp.lt.s32.totalorder %v358, 8
    %v360 = vsel %vm359, 1, 0
    %vm361 = vcmp.eq.s32.totalorder %v360, 1
    %v362 = vsel %vm361, %v352, -inf
    %363 = vmax.xlane.f32.xlu0 %v362
    %v364 = vpop.xlane.xlu0 %363
    %v365 = vsub.f32 %v362, %v364
    %v366 = vmul.f32 %v365, 1.442695
    %v367 = vpow.pop %v366
    %v368 = vsel %vm361, %v367, 0.0
    %369 = vadd.xlane.f32.xlu0 %v368
    %v370 = vpop.xlane.xlu0 %369
    %v371 = vrcp.pop %v370
    %v372 = vmul.f32 %v368, %v371
    %v373 = vsel %vm361, %v372, %v352
    %374 = vst [vmem:[#allocation7] sm:$0xff] %v373
    // Predicated region
    $region30: #{actor_critic_forward.1} parent=1 // pred_check
      _
    $region31: #{actor_critic_forward.1} parent=1 // pred_check_branch
      %376 = sbr.rel (0) target = $region33
    $region32: #{actor_critic_forward.1} parent=1 // pred_region
      // Predicated region
      $region34: #{actor_critic_forward.1} parent=32 // pred_check
        _
      $region35: #{actor_critic_forward.1} parent=32 // pred_check_branch
        %378 = sbr.rel (0) target = $region37
      $region36: #{actor_critic_forward.1} parent=32 // pred_region
        // Predicated region
        $region38: #{actor_critic_forward.1} parent=36 // pred_check
          _
        $region39: #{actor_critic_forward.1} parent=36 // pred_check_branch
          %380 = sbr.rel target = $region41
        $region40: #{actor_critic_forward.1} parent=36 // pred_region
          // Predicated region
          $region53: #{actor_critic_forward.1} parent=40 // pred_check
            _
          $region54: #{actor_critic_forward.1} parent=40 // pred_check_branch
            %395 = sbr.rel (0) target = $region56
          $region55: #{actor_critic_forward.1} parent=40 // pred_region
            loop: start=0, step=1, limit=1
            $region57: #{actor_critic_forward.1} parent=55 // loop_pre_header
              _
            $region58: #{actor_critic_forward.1} parent=55 // loop_header
              %s398 = sphi 0, %s402
              %p399 = scmp.ge.s32.totalorder %s398, 1
              %s403 = sphi [#allocation7], [#allocation7]
              %s404 = sphi %s4, %s4
            $region59: #{actor_critic_forward.1} parent=55 // loop_header_branch
              %401 = sbr.rel (%p399) target = $region63
            $region60: #{actor_critic_forward.1} parent=55 // loop_body
              %v405 = vld [vmem:[%s403] sm:$0x3]
              %406 = vst [vmem:[%s404] sm:$0x3] %v405
            $region61: #{actor_critic_forward.1} parent=55 // loop_footer
              %s402 = sadd.s32 1, %s398
            $region62: #{actor_critic_forward.1} parent=55 // loop_footer_branch
              %397 = sbr.rel target = $region58
            $region63: #{actor_critic_forward.1} parent=55 // loop_exit
              _
          $region56: #{actor_critic_forward.1} parent=40 // pred_fallthru
            _
        $region41: #{actor_critic_forward.1} parent=36 // pred_fallthru
          _
        // Predicated region
        $region42: #{actor_critic_forward.1} parent=36 // pred_check
          _
        $region43: #{actor_critic_forward.1} parent=36 // pred_check_branch
          %382 = sbr.rel (0) target = $region45
        $region44: #{actor_critic_forward.1} parent=36 // pred_region
          loop: start=0, step=1, limit=1
          $region46: #{actor_critic_forward.1} parent=44 // loop_pre_header
            _
          $region47: #{actor_critic_forward.1} parent=44 // loop_header
            %s385 = sphi 0, %s389
            %p386 = scmp.ge.s32.totalorder %s385, 1
            %s390 = sphi [#allocation7], [#allocation7]
            %s391 = sphi %s4, %s4
          $region48: #{actor_critic_forward.1} parent=44 // loop_header_branch
            %388 = sbr.rel (%p386) target = $region52
          $region49: #{actor_critic_forward.1} parent=44 // loop_body
            %v392 = vld [vmem:[%s390] sm:$0x3]
            %393 = vst [vmem:[%s391] sm:$0x3] %v392
          $region50: #{actor_critic_forward.1} parent=44 // loop_footer
            %s389 = sadd.s32 1, %s385
          $region51: #{actor_critic_forward.1} parent=44 // loop_footer_branch
            %384 = sbr.rel target = $region47
          $region52: #{actor_critic_forward.1} parent=44 // loop_exit
            _
        $region45: #{actor_critic_forward.1} parent=36 // pred_fallthru
          _
      $region37: #{actor_critic_forward.1} parent=32 // pred_fallthru
        _
      %407 = vnop
    $region33: #{actor_critic_forward.1} parent=1 // pred_fallthru
      _
    // Predicated region
    $region64: #{actor_critic_forward.1} parent=1 // pred_check
      _
    $region65: #{actor_critic_forward.1} parent=1 // pred_check_branch
      %409 = sbr.rel (0) target = $region67
    $region66: #{actor_critic_forward.1} parent=1 // pred_region
      _
    $region67: #{actor_critic_forward.1} parent=1 // pred_fallthru
      _
    %410 = vsyncpa [#allocation3], 1
    %411 = vsyncpa [#allocation5], 1

</llo_original>
